<compile_context>
chip_gen: v5e
topology: v5e:2x2
jax: 0.10.0
libtpu: 0.0.40
codegen_flags: <defaults>
</compile_context>

<pallas_src>
import functools

import jax
import jax.numpy as jnp
from jax.experimental import pallas as pl
from jax.experimental.pallas import tpu as pltpu

KERNEL_SIZE = 25            # module default (must be odd, see assert in wrapper)
_MAX_SEQ_TILE = 1024        # max L rows (sublanes) per block
_MAX_LANE_TILE = 512        # max lanes per block (multiple of 128)


def _cdiv(a: int, b: int) -> int:
    return -(-a // b)


def _round_up(v: int, m: int) -> int:
    return _cdiv(v, m) * m


def _seq_tiling(seq_len: int, halo: int):
    """Pick an L tile (multiple of `halo`) and the resulting number of L tiles."""
    num_l = _cdiv(seq_len, _MAX_SEQ_TILE)
    # Make sure a big single-tile problem still has >=2 parallel grid steps so it
    # shards across v7x's two TensorCores (per-step overhead ~0.35 us).
    if num_l == 1 and seq_len >= 256:
        num_l = 2
    tl = _round_up(_cdiv(seq_len, num_l), halo)
    num_l = _cdiv(seq_len, tl)
    return tl, num_l


def _moving_average_kernel(ltail_ref, body_ref, rtail_ref, o_ref, *,
                           kernel_size: int, halo: int, seq_len: int, l_axis: int):
    """Windowed mean along sublanes for one (TL, TN) output tile.

    ltail_ref: (halo, TN)  rows [l*TL - halo, l*TL)        of the unpadded input
    body_ref : (TL,   TN)  rows [l*TL,        (l+1)*TL)
    rtail_ref: (halo, TN)  rows [(l+1)*TL,    (l+1)*TL + halo)
    Boundary tiles get clamped / ragged blocks; the row-validity mask below turns
    every out-of-range row into the zero padding AvgPool1d expects.
    """
    pad = kernel_size // 2
    tl = o_ref.shape[0]
    l = pl.program_id(l_axis)

    # Assemble the (TL + 2*halo, TN) window; all pieces are sublane-aligned.
    # (concat + cast + select fuse into the single pass that materializes `w`.)
    w = jnp.concatenate(
        [ltail_ref[...], body_ref[...], rtail_ref[...]], axis=0
    ).astype(jnp.float32)
    m = tl + 2 * halo

    # Row validity: global row index of each window row vs. the real sequence.
    # Zeros outside [0, seq_len) == count_include_pad=True padding, and also
    # masks garbage from clamped index_maps / ragged boundary DMAs.
    row = jax.lax.broadcasted_iota(jnp.int32, (m, 1), 0)
    g = row + (l * tl - halo)
    w = jnp.where((g >= 0) & (g < seq_len), w, 0.0)

    # k-tap running sum via binary (doubling) decomposition.  The output offset
    # (halo - pad) is folded into the accumulation slices, so no extra final
    # rotate; only {acc, current power p} stay live.
    off = halo - pad
    acc = None
    placed = 0                      # window width already folded into acc
    p, pw, rem = w, 1, kernel_size  # p[u] = sum of pw consecutive rows at u
    while rem:
        if rem & pw:
            start = off + placed
            piece = p[start:start + tl]
            acc = piece if acc is None else acc + piece
            placed += pw
            rem -= pw
        if rem:
            lp = p.shape[0] - pw
            p = p[:lp] + p[pw:pw + lp]
            pw *= 2

    o_ref[...] = (acc * (1.0 / kernel_size)).astype(o_ref.dtype)


def _pool_seq_2d(x2: jax.Array, kernel_size: int) -> jax.Array:
    """Moving average along axis 0 of a (L, N) array (N = folded batch*channels)."""
    L, N = x2.shape
    pad = kernel_size // 2
    halo = max(8, _round_up(pad, 8))          # 8-aligned halo block (16 for k=25)
    tl, num_l = _seq_tiling(L, halo)
    s = tl // halo                            # body-tile size in halo blocks
    last_hblk = _cdiv(L, halo) - 1            # last in-bounds halo-block index
    tn = N if N <= _MAX_LANE_TILE else _MAX_LANE_TILE
    num_n = _cdiv(N, tn)

    kern = functools.partial(_moving_average_kernel, kernel_size=kernel_size,
                             halo=halo, seq_len=L, l_axis=0)

    return pl.pallas_call(
        kern,
        out_shape=jax.ShapeDtypeStruct((L, N), x2.dtype),
        grid_spec=pltpu.PrefetchScalarGridSpec(
            num_scalar_prefetch=0,
            grid=(num_l, num_n),
            in_specs=[
                # left halo: rows [l*tl - halo, l*tl)   (clamped at l == 0)
                pl.BlockSpec((halo, tn),
                             lambda l, n: (jnp.maximum(l * s - 1, 0), n)),
                # body: rows [l*tl, (l+1)*tl)
                pl.BlockSpec((tl, tn), lambda l, n: (l, n)),
                # right halo: rows [(l+1)*tl, (l+1)*tl + halo)   (clamped at end)
                pl.BlockSpec((halo, tn),
                             lambda l, n: (jnp.minimum((l + 1) * s, last_hblk), n)),
            ],
            out_specs=pl.BlockSpec((tl, tn), lambda l, n: (l, n)),
        ),
        compiler_params=pltpu.CompilerParams(
            dimension_semantics=("parallel", "parallel"),
            # Max working set (tl=1024, tn=512, f32) is ~15-18 MiB incl. double
            # buffers and tree temps — comfortable headroom on v7x's 64 MiB.
            vmem_limit_bytes=32 * 1024 * 1024,
        ),
    )(x2, x2, x2)


def _pool_seq_3d(x: jax.Array, kernel_size: int) -> jax.Array:
    """Moving average along axis 1 of (B, L, C) directly — no relayout (C >= 128)."""
    B, L, C = x.shape
    pad = kernel_size // 2
    halo = max(8, _round_up(pad, 8))
    tl, num_l = _seq_tiling(L, halo)
    s = tl // halo
    last_hblk = _cdiv(L, halo) - 1
    tc = C if C <= _MAX_LANE_TILE else _MAX_LANE_TILE
    num_c = _cdiv(C, tc)

    kern = functools.partial(_moving_average_kernel, kernel_size=kernel_size,
                             halo=halo, seq_len=L, l_axis=1)

    return pl.pallas_call(
        kern,
        out_shape=jax.ShapeDtypeStruct((B, L, C), x.dtype),
        grid_spec=pltpu.PrefetchScalarGridSpec(
            num_scalar_prefetch=0,
            grid=(B, num_l, num_c),
            in_specs=[
                pl.BlockSpec((None, halo, tc),
                             lambda b, l, c: (b, jnp.maximum(l * s - 1, 0), c)),
                pl.BlockSpec((None, tl, tc), lambda b, l, c: (b, l, c)),
                pl.BlockSpec((None, halo, tc),
                             lambda b, l, c: (b, jnp.minimum((l + 1) * s, last_hblk), c)),
            ],
            out_specs=pl.BlockSpec((None, tl, tc), lambda b, l, c: (b, l, c)),
        ),
        compiler_params=pltpu.CompilerParams(
            dimension_semantics=("parallel", "parallel", "parallel"),
            vmem_limit_bytes=32 * 1024 * 1024,
        ),
    )(x, x, x)


def moving_average(x: jax.Array, kernel_size: int = KERNEL_SIZE) -> jax.Array:
    """x: (B, L, C) -> trend: (B, L, C), same dtype. Matches AvgPool1d(k, 1, k//2)."""
    assert kernel_size % 2 == 1, "even kernel_size changes AvgPool1d output length"
    B, L, C = x.shape
    if C >= 128:
        # Lane-friendly channel count: pool directly on (B, L, C); L is already
        # the sublane axis, so no transpose / un-transpose HBM passes.
        return _pool_seq_3d(x, kernel_size)
    # Small C: fold all batch*channel series onto the lane axis so the pooled
    # axis sits on sublanes.  (For B*C < 128 the lanes are not full; a further
    # L-segment fold could fill them but is not worth the relayout complexity
    # for this memory-bound op.)
    x2 = jnp.transpose(x, (1, 0, 2)).reshape(L, B * C)
    y = _pool_seq_2d(x2, kernel_size)
    return jnp.transpose(y.reshape(L, B, C), (1, 0, 2))


def moving_average_ref(x: jax.Array, kernel_size: int = KERNEL_SIZE) -> jax.Array:
    """Pure-JAX reference matching nn.AvgPool1d(k, stride=1, padding=k//2)."""
    pad = kernel_size // 2
    B, L, C = x.shape
    xp = jnp.pad(x.astype(jnp.float32), ((0, 0), (pad, pad), (0, 0)))
    out = jnp.zeros((B, L, C), jnp.float32)
    for i in range(kernel_size):
        out = out + xp[:, i:i + L, :]
    return (out / kernel_size).astype(x.dtype)


if __name__ == "__main__":
    key = jax.random.PRNGKey(0)
    k1, k2, k3 = jax.random.split(key, 3)

    # Small shape consistent with the forward: (batch, seq_len, channels).
    B, L, C = 2, 16, 8
    x = jax.random.normal(k1, (B, L, C), dtype=jnp.float32)
    trend = jax.block_until_ready(moving_average(x, KERNEL_SIZE))
    ref = moving_average_ref(x, KERNEL_SIZE)
    assert trend.shape == (B, L, C)
    assert jnp.allclose(trend, ref, atol=1e-4, rtol=1e-4), "mismatch (small, folded path)"

    # Multi-L-tile path: halo crossing tile boundaries + ragged last tile.
    x2 = jax.random.normal(k2, (2, 600, 8), dtype=jnp.float32)
    trend2 = jax.block_until_ready(moving_average(x2, KERNEL_SIZE))
    ref2 = moving_average_ref(x2, KERNEL_SIZE)
    assert trend2.shape == x2.shape
    assert jnp.allclose(trend2, ref2, atol=1e-4, rtol=1e-4), "mismatch (tiled, folded path)"

    # Lane-friendly channel count -> direct (no-relayout) 3D path.
    x3 = jax.random.normal(k3, (2, 300, 128), dtype=jnp.float32)
    trend3 = jax.block_until_ready(moving_average(x3, KERNEL_SIZE))
    ref3 = moving_average_ref(x3, KERNEL_SIZE)
    assert trend3.shape == x3.shape
    assert jnp.allclose(trend3, ref3, atol=1e-4, rtol=1e-4), "mismatch (direct path)"

    print("KERNEL_OK")
</pallas_src>

<mosaic_0001>
module attributes {stable_mosaic.version = 11 : i64} {
  func.func @_moving_average_kernel(%arg0: i32, %arg1: i32, %arg2: memref<16x16xf32, #tpu.memory_space<vmem>>, %arg3: memref<16x16xf32, #tpu.memory_space<vmem>>, %arg4: memref<16x16xf32, #tpu.memory_space<vmem>>, %arg5: memref<16x16xf32, #tpu.memory_space<vmem>>) attributes {dimension_semantics = [#tpu.dimension_semantics<parallel>, #tpu.dimension_semantics<parallel>], iteration_bounds = array<i64: 1, 1>, scalar_prefetch = 0 : i64, scratch_operands = 0 : i64, tpu.core_type = #tpu.core_type<tc>, window_params = [{transform_indices = @transform_0, window_bounds = array<i64: 16, 16>}, {transform_indices = @transform_1, window_bounds = array<i64: 16, 16>}, {transform_indices = @transform_2, window_bounds = array<i64: 16, 16>}, {transform_indices = @transform_3, window_bounds = array<i64: 16, 16>}]} {
    %c0 = arith.constant 0 : index
    %c0_0 = arith.constant 0 : index
    %0 = vector.load %arg2[%c0, %c0_0] : memref<16x16xf32, #tpu.memory_space<vmem>>, vector<16x16xf32>
    %c0_1 = arith.constant 0 : index
    %c0_2 = arith.constant 0 : index
    %1 = vector.load %arg3[%c0_1, %c0_2] : memref<16x16xf32, #tpu.memory_space<vmem>>, vector<16x16xf32>
    %c0_3 = arith.constant 0 : index
    %c0_4 = arith.constant 0 : index
    %2 = vector.load %arg4[%c0_3, %c0_4] : memref<16x16xf32, #tpu.memory_space<vmem>>, vector<16x16xf32>
    %3 = tpu.concatenate %0, %1, %2 in 0 : vector<16x16xf32>, vector<16x16xf32>, vector<16x16xf32> -> vector<48x16xf32>
    %4 = tpu.iota {dimensions = array<i32: 0>} : vector<48x1xi32>
    %c16_i32 = arith.constant 16 : i32
    %5 = arith.muli %arg0, %c16_i32 : i32
    %c16_i32_5 = arith.constant 16 : i32
    %6 = arith.subi %5, %c16_i32_5 : i32
    %7 = vector.broadcast %6 : i32 to vector<48x1xi32>
    %8 = arith.addi %4, %7 : vector<48x1xi32>
    %c0_i32 = arith.constant 0 : i32
    %9 = vector.broadcast %c0_i32 : i32 to vector<48x1xi32>
    %10 = arith.cmpi sge, %8, %9 : vector<48x1xi32>
    %c16_i32_6 = arith.constant 16 : i32
    %11 = vector.broadcast %c16_i32_6 : i32 to vector<48x1xi32>
    %12 = arith.cmpi slt, %8, %11 : vector<48x1xi32>
    %13 = arith.andi %10, %12 : vector<48x1xi1>
    %cst = arith.constant 0.000000e+00 : f32
    %14 = vector.shape_cast %13 : vector<48x1xi1> to vector<48x1xi1>
    %15 = vector.broadcast %14 : vector<48x1xi1> to vector<48x16xi1>
    %16 = vector.broadcast %cst : f32 to vector<48x16xf32>
    %17 = arith.select %15, %3, %16 : vector<48x16xi1>, vector<48x16xf32>
    %18 = vector.extract_strided_slice %17 {offsets = [4, 0], sizes = [16, 16], strides = [1, 1]} : vector<48x16xf32> to vector<16x16xf32>
    %19 = vector.extract_strided_slice %17 {offsets = [0, 0], sizes = [47, 16], strides = [1, 1]} : vector<48x16xf32> to vector<47x16xf32>
    %20 = vector.extract_strided_slice %17 {offsets = [1, 0], sizes = [47, 16], strides = [1, 1]} : vector<48x16xf32> to vector<47x16xf32>
    %21 = arith.addf %19, %20 : vector<47x16xf32>
    %22 = vector.extract_strided_slice %21 {offsets = [0, 0], sizes = [45, 16], strides = [1, 1]} : vector<47x16xf32> to vector<45x16xf32>
    %23 = vector.extract_strided_slice %21 {offsets = [2, 0], sizes = [45, 16], strides = [1, 1]} : vector<47x16xf32> to vector<45x16xf32>
    %24 = arith.addf %22, %23 : vector<45x16xf32>
    %25 = vector.extract_strided_slice %24 {offsets = [0, 0], sizes = [41, 16], strides = [1, 1]} : vector<45x16xf32> to vector<41x16xf32>
    %26 = vector.extract_strided_slice %24 {offsets = [4, 0], sizes = [41, 16], strides = [1, 1]} : vector<45x16xf32> to vector<41x16xf32>
    %27 = arith.addf %25, %26 : vector<41x16xf32>
    %28 = vector.extract_strided_slice %27 {offsets = [5, 0], sizes = [16, 16], strides = [1, 1]} : vector<41x16xf32> to vector<16x16xf32>
    %29 = arith.addf %18, %28 : vector<16x16xf32>
    %30 = vector.extract_strided_slice %27 {offsets = [0, 0], sizes = [33, 16], strides = [1, 1]} : vector<41x16xf32> to vector<33x16xf32>
    %31 = vector.extract_strided_slice %27 {offsets = [8, 0], sizes = [33, 16], strides = [1, 1]} : vector<41x16xf32> to vector<33x16xf32>
    %32 = arith.addf %30, %31 : vector<33x16xf32>
    %33 = vector.extract_strided_slice %32 {offsets = [13, 0], sizes = [16, 16], strides = [1, 1]} : vector<33x16xf32> to vector<16x16xf32>
    %34 = arith.addf %29, %33 : vector<16x16xf32>
    %cst_7 = arith.constant 4.000000e-02 : f32
    %35 = vector.broadcast %cst_7 : f32 to vector<16x16xf32>
    %36 = arith.mulf %34, %35 : vector<16x16xf32>
    %c0_8 = arith.constant 0 : index
    %c0_9 = arith.constant 0 : index
    %37 = vector.load %arg5[%c0_8, %c0_9] : memref<16x16xf32, #tpu.memory_space<vmem>>, vector<16x16xf32>
    tpu.vector_store %arg5[%c0_8, %c0_9], %36 {strides = array<i32>} : memref<16x16xf32, #tpu.memory_space<vmem>>, vector<16x16xf32>,
    return
  }
  func.func @transform_0(%arg0: i32, %arg1: i32) -> (i32, i32) {
    %c1_i32 = arith.constant 1 : i32
    %0 = arith.muli %arg0, %c1_i32 : i32
    %c1_i32_0 = arith.constant 1 : i32
    %1 = arith.subi %0, %c1_i32_0 : i32
    %c0_i32 = arith.constant 0 : i32
    %2 = arith.maxsi %1, %c0_i32 : i32
    %c0_i32_1 = arith.constant 0 : i32
    return %2, %arg1 : i32, i32
  }
  func.func @transform_1(%arg0: i32, %arg1: i32) -> (i32, i32) {
    %c0_i32 = arith.constant 0 : i32
    return %arg0, %arg1 : i32, i32
  }
  func.func @transform_2(%arg0: i32, %arg1: i32) -> (i32, i32) {
    %c1_i32 = arith.constant 1 : i32
    %0 = arith.addi %arg0, %c1_i32 : i32
    %c1_i32_0 = arith.constant 1 : i32
    %1 = arith.muli %0, %c1_i32_0 : i32
    %c0_i32 = arith.constant 0 : i32
    %2 = arith.minsi %1, %c0_i32 : i32
    %c0_i32_1 = arith.constant 0 : i32
    return %2, %arg1 : i32, i32
  }
  func.func @transform_3(%arg0: i32, %arg1: i32) -> (i32, i32) {
    %c0_i32 = arith.constant 0 : i32
    return %arg0, %arg1 : i32, i32
  }
}

</mosaic_0001>

<llo_original>
// kernel: tpu_custom_call.1
$region0: #{tpu_custom_call.1}
  #allocation0 [shape = 'u32[]', space=smem, size = 0x4, offset = 0x4, fixed_abs, tag = 'smem constant byte address 0x4 - core index']
  #allocation1 [shape = 'u32[72,128]{1,0:T(1,128)}', space=vmem, size = 0x9000, scoped, tag = 'internal scratch']
  %s0 = inlined_call_operand.hbm [shape: f32[16,16], index: 0, kind: input, shape index: {}]
  %s1 = inlined_call_operand.hbm [shape: f32[16,16], index: 1, kind: input, shape index: {}]
  %s2 = inlined_call_operand.hbm [shape: f32[16,16], index: 2, kind: input, shape index: {}]
  %s3 = inlined_call_operand.hbm [shape: f32[16,16], index: 3, kind: output, shape index: {}]
  %s4 = sld [smem:[#allocation0]]
  $region34: #{tpu_custom_call.1} parent=0
    _
  %s6 = ssub.s32 1, %s4
  %s7 = scalar_select 0, %s6, %s4
  $region1: #{tpu_custom_call.1} parent=0
    #allocation2 [shape = 'u8[8192]{0}', space=vmem, size = 0x2000, scoped, tag = 'input window, operand 0, single buffered']
    #allocation3 [shape = 's32[1]{0}', space=sflag, size = 0x4, scoped, tag = 'scoped memory for tpu_custom_call.1']
    #allocation4 [shape = 's32[1]{0}', space=sflag, size = 0x4, scoped, tag = 'scoped memory for tpu_custom_call.1']
    #allocation5 [shape = 'u8[8192]{0}', space=vmem, size = 0x2000, scoped, tag = 'input window, operand 1, single buffered']
    #allocation6 [shape = 's32[1]{0}', space=sflag, size = 0x4, scoped, tag = 'scoped memory for tpu_custom_call.1']
    #allocation7 [shape = 'u8[8192]{0}', space=vmem, size = 0x2000, scoped, tag = 'input window, operand 2, single buffered']
    #allocation8 [shape = 'u8[8192]{0}', space=vmem, size = 0x2000, scoped, tag = 'output window, operand 0, single buffered']
    %8 = vsyncpa [#allocation3], 0
    %9 = vsyncpa [#allocation6], 0
    %10 = vsyncpa [#allocation4], 0
    // Predicated region
    $region2: #{tpu_custom_call.1} parent=1 // pred_check
      _
    $region3: #{tpu_custom_call.1} parent=1 // pred_check_branch
      %12 = sbr.rel (0) target = $region5
    $region4: #{tpu_custom_call.1} parent=1 // pred_region
      %s13 = ssub.s32 0, 1
      %p14 = scmp.gt.s32.totalorder %s13, 0
      %s15 = scalar_select %p14, %s13, 0
      %s16 = smul.u32 2, %s15
      %18 = vsyncadd [#allocation3], 0
      %s19 = smul.addr %s16, 8
      %s20 = scalar_lea.hbm %s0, %s19
      %s21 = sshll.u32 %s20, 4
      %s22 = int_to_ptr.hbm [resolvable:$true] %s21
      %s23 = sshll.u32 [#allocation2], 4
      %s24 = int_to_ptr.vmem [resolvable:$true] %s23
      %29 = dma.hbm_to_vmem [thread:$0]  %s22, 256, %s24, [#allocation3], 128, 128, 8
    $region5: #{tpu_custom_call.1} parent=1 // pred_fallthru
      _
    // Predicated region
    $region6: #{tpu_custom_call.1} parent=1 // pred_check
      _
    $region7: #{tpu_custom_call.1} parent=1 // pred_check_branch
      %31 = sbr.rel (0) target = $region9
    $region8: #{tpu_custom_call.1} parent=1 // pred_region
      %33 = vsyncadd [#allocation6], 0
      %s34 = sshll.u32 %s1, 4
      %s35 = int_to_ptr.hbm [resolvable:$true] %s34
      %s36 = sshll.u32 [#allocation5], 4
      %s37 = int_to_ptr.vmem [resolvable:$true] %s36
      %42 = dma.hbm_to_vmem [thread:$0]  %s35, 256, %s37, [#allocation6], 128, 128, 8
    $region9: #{tpu_custom_call.1} parent=1 // pred_fallthru
      _
    // Predicated region
    $region10: #{tpu_custom_call.1} parent=1 // pred_check
      _
    $region11: #{tpu_custom_call.1} parent=1 // pred_check_branch
      %44 = sbr.rel (0) target = $region13
    $region12: #{tpu_custom_call.1} parent=1 // pred_region
      %s45 = sadd.s32 0, 1
      %p46 = scmp.lt.s32.totalorder %s45, 0
      %s47 = scalar_select %p46, %s45, 0
      %s48 = smul.u32 2, %s47
      %50 = vsyncadd [#allocation6], 0
      %s51 = smul.addr %s48, 8
      %s52 = scalar_lea.hbm %s2, %s51
      %s53 = sshll.u32 %s52, 4
      %s54 = int_to_ptr.hbm [resolvable:$true] %s53
      %s55 = sshll.u32 [#allocation7], 4
      %s56 = int_to_ptr.vmem [resolvable:$true] %s55
      %61 = dma.hbm_to_vmem [thread:$0]  %s54, 256, %s56, [#allocation6], 128, 128, 8
    $region13: #{tpu_custom_call.1} parent=1 // pred_fallthru
      _
    // Predicated region
    $region14: #{tpu_custom_call.1} parent=1 // pred_check
      _
    $region15: #{tpu_custom_call.1} parent=1 // pred_check_branch
      %63 = sbr.rel (0) target = $region17
    $region16: #{tpu_custom_call.1} parent=1 // pred_region
      %65 = dma.done [#allocation3], 256
    $region17: #{tpu_custom_call.1} parent=1 // pred_fallthru
      _
    // Predicated region
    $region18: #{tpu_custom_call.1} parent=1 // pred_check
      _
    $region19: #{tpu_custom_call.1} parent=1 // pred_check_branch
      %67 = sbr.rel (0) target = $region21
    $region20: #{tpu_custom_call.1} parent=1 // pred_region
      %69 = dma.done [#allocation6], 256
    $region21: #{tpu_custom_call.1} parent=1 // pred_fallthru
      _
    // Predicated region
    $region22: #{tpu_custom_call.1} parent=1 // pred_check
      _
    $region23: #{tpu_custom_call.1} parent=1 // pred_check_branch
      %71 = sbr.rel (0) target = $region25
    $region24: #{tpu_custom_call.1} parent=1 // pred_region
      %73 = dma.done [#allocation6], 256
    $region25: #{tpu_custom_call.1} parent=1 // pred_fallthru
      _
    %s74 = ssub.s32 0, 1
    %p75 = scmp.gt.s32.totalorder %s74, 0
    %s76 = scalar_select %p75, %s74, 0
    %s77 = smul.u32 2, %s76
    %s78 = sadd.s32 0, 1
    %p79 = scmp.lt.s32.totalorder %s78, 0
    %s80 = scalar_select %p79, %s78, 0
    %s81 = smul.u32 2, %s80
    %v82 = vld [vmem:[#allocation2] sm:$0xff]
    %v83 = vld [vmem:[#allocation2 + $0x8] sm:$0xff]
    %v84 = vld [vmem:[#allocation5] sm:$0xff]
    %v85 = vld [vmem:[#allocation5 + $0x8] sm:$0xff]
    %v86 = vld [vmem:[#allocation7] sm:$0xff]
    %v87 = vld [vmem:[#allocation7 + $0x8] sm:$0xff]
    %v88 = vlaneseq
    %v89 = vshrl.u32 %v88, 7
    %v90 = vadd.s32 %v89, 8
    %v91 = vadd.s32 %v89, 16
    %v92 = vadd.s32 %v89, 24
    %v93 = vadd.s32 %v89, 32
    %v94 = vadd.s32 %v89, 40
    %s95 = smul.u32 0, 16
    %s96 = ssub.s32 %s95, 16
    %v97 = vstv %s96
    %v98 = vadd.s32 %v89, %v97
    %v99 = vadd.s32 %v90, %v97
    %v100 = vadd.s32 %v91, %v97
    %v101 = vadd.s32 %v92, %v97
    %v102 = vadd.s32 %v93, %v97
    %v103 = vadd.s32 %v94, %v97
    %vm104 = vcmp.ge.s32.totalorder %v98, 0
    %vm105 = vcmp.ge.s32.totalorder %v99, 0
    %vm106 = vcmp.ge.s32.totalorder %v100, 0
    %vm107 = vcmp.ge.s32.totalorder %v101, 0
    %vm108 = vcmp.ge.s32.totalorder %v102, 0
    %vm109 = vcmp.ge.s32.totalorder %v103, 0
    %vm110 = vcmp.lt.s32.totalorder %v98, 16
    %vm111 = vcmp.lt.s32.totalorder %v99, 16
    %vm112 = vcmp.lt.s32.totalorder %v100, 16
    %vm113 = vcmp.lt.s32.totalorder %v101, 16
    %vm114 = vcmp.lt.s32.totalorder %v102, 16
    %vm115 = vcmp.lt.s32.totalorder %v103, 16
    %vm116 = vmand %vm104, %vm110
    %vm117 = vmand %vm105, %vm111
    %vm118 = vmand %vm106, %vm112
    %vm119 = vmand %vm107, %vm113
    %vm120 = vmand %vm108, %vm114
    %vm121 = vmand %vm109, %vm115
    %v122 = vsel %vm116, 1, 0
    %v123 = vsel %vm117, 1, 0
    %v124 = vsel %vm118, 1, 0
    %v125 = vsel %vm119, 1, 0
    %v126 = vsel %vm120, 1, 0
    %v127 = vsel %vm121, 1, 0
    %vm128 = vcmp.eq.s32.totalorder %v122, 1
    %vm129 = vcmp.eq.s32.totalorder %v123, 1
    %vm130 = vcmp.eq.s32.totalorder %v124, 1
    %vm131 = vcmp.eq.s32.totalorder %v125, 1
    %vm132 = vcmp.eq.s32.totalorder %v126, 1
    %vm133 = vcmp.eq.s32.totalorder %v127, 1
    %v134 = vsel %vm128, %v82, 0.0
    %v135 = vsel %vm129, %v83, 0.0
    %v136 = vsel %vm130, %v84, 0.0
    %v137 = vsel %vm131, %v85, 0.0
    %v138 = vsel %vm132, %v86, 0.0
    %v139 = vsel %vm133, %v87, 0.0
    %vm146 = vcmask 1046528
    %v147 = vrot.slane %v134, 1
    %v148 = vrot.slane %v135, 1
    %v149 = vsel %vm146, %v147, %v148
    %v150 = vrot.slane %v136, 1
    %v151 = vsel %vm146, %v148, %v150
    %v152 = vrot.slane %v137, 1
    %v153 = vsel %vm146, %v150, %v152
    %v154 = vrot.slane %v138, 1
    %v155 = vsel %vm146, %v152, %v154
    %v156 = vrot.slane %v139, 1
    %v157 = vsel %vm146, %v154, %v156
    %v164 = vadd.f32 %v134, %v149
    %v165 = vadd.f32 %v135, %v151
    %v166 = vadd.f32 %v136, %v153
    %v167 = vadd.f32 %v137, %v155
    %v168 = vadd.f32 %v138, %v157
    %v169 = vadd.f32 %v139, %v156
    %vm176 = vcmask 1045504
    %v177 = vrot.slane %v164, 2
    %v178 = vrot.slane %v165, 2
    %v179 = vsel %vm176, %v177, %v178
    %v180 = vrot.slane %v166, 2
    %v181 = vsel %vm176, %v178, %v180
    %v182 = vrot.slane %v167, 2
    %v183 = vsel %vm176, %v180, %v182
    %v184 = vrot.slane %v168, 2
    %v185 = vsel %vm176, %v182, %v184
    %v186 = vrot.slane %v169, 2
    %v187 = vsel %vm176, %v184, %v186
    %v194 = vadd.f32 %v164, %v179
    %v195 = vadd.f32 %v165, %v181
    %v196 = vadd.f32 %v166, %v183
    %v197 = vadd.f32 %v167, %v185
    %v198 = vadd.f32 %v168, %v187
    %v199 = vadd.f32 %v169, %v186
    %vm206 = vcmask 1043456
    %v207 = vrot.slane %v194, 4
    %v208 = vrot.slane %v195, 4
    %v209 = vsel %vm206, %v207, %v208
    %v210 = vrot.slane %v196, 4
    %v211 = vsel %vm206, %v208, %v210
    %v212 = vrot.slane %v197, 4
    %v213 = vsel %vm206, %v210, %v212
    %v214 = vrot.slane %v198, 4
    %v215 = vsel %vm206, %v212, %v214
    %v216 = vrot.slane %v199, 4
    %v217 = vsel %vm206, %v214, %v216
    %v223 = vadd.f32 %v194, %v209
    %v224 = vadd.f32 %v195, %v211
    %v225 = vadd.f32 %v196, %v213
    %v226 = vadd.f32 %v197, %v215
    %v227 = vadd.f32 %v198, %v217
    %v231 = vrot.slane %v223, 1
    %v232 = vrot.slane %v224, 1
    %v233 = vsel %vm146, %v231, %v232
    %v234 = vrot.slane %v225, 1
    %v235 = vsel %vm146, %v232, %v234
    %v239 = vadd.f32 %v134, %v233
    %v240 = vadd.f32 %v135, %v235
    %v241 = vadd.f32 %v136, %v234
    %v242 = vadd.f32 %v224, %v225
    %v243 = vadd.f32 %v225, %v226
    %v244 = vadd.f32 %v226, %v227
    %v248 = vrot.slane %v242, 1
    %v249 = vrot.slane %v243, 1
    %v250 = vsel %vm146, %v248, %v249
    %v251 = vrot.slane %v244, 1
    %v252 = vsel %vm146, %v249, %v251
    %v256 = vadd.f32 %v239, %v250
    %v257 = vadd.f32 %v240, %v252
    %v258 = vadd.f32 %v241, %v251
    %v259 = vmul.f32 %v256, 0.04
    %v260 = vmul.f32 %v257, 0.04
    %v261 = vmul.f32 %v258, 0.04
    %vm262 = vcmask 130052
    %263 = vst.msk [vmem:[#allocation8 - $0x4] sm:$0xf0] %vm262, %v259
    %vm264 = vcmask 130048
    %265 = vst.msk [vmem:[#allocation8 + $0x4] sm:$0xff] %vm264, %v260
    %vm266 = vcmask 125952
    %267 = vst.msk [vmem:[#allocation8 + $0xc] sm:$0xf] %vm266, %v261
    // Predicated region
    $region26: #{tpu_custom_call.1} parent=1 // pred_check
      _
    $region27: #{tpu_custom_call.1} parent=1 // pred_check_branch
      %269 = sbr.rel (0) target = $region29
    $region28: #{tpu_custom_call.1} parent=1 // pred_region
      %271 = vsyncadd [#allocation4], 0
      %s272 = sshll.u32 [#allocation8], 4
      %s273 = int_to_ptr.vmem [resolvable:$true] %s272
      %s274 = sshll.u32 %s3, 4
      %s275 = int_to_ptr.hbm [resolvable:$true] %s274
      %280 = dma.vmem_to_hbm [thread:$0]  %s273, 256, %s275, [#allocation4], 128, 128, 8
    $region29: #{tpu_custom_call.1} parent=1 // pred_fallthru
      _
    // Predicated region
    $region30: #{tpu_custom_call.1} parent=1 // pred_check
      _
    $region31: #{tpu_custom_call.1} parent=1 // pred_check_branch
      %282 = sbr.rel (0) target = $region33
    $region32: #{tpu_custom_call.1} parent=1 // pred_region
      %284 = dma.done [#allocation4], 256
    $region33: #{tpu_custom_call.1} parent=1 // pred_fallthru
      _
    %285 = vsyncpa [#allocation3], 1
    %286 = vsyncpa [#allocation6], 1
    %287 = vsyncpa [#allocation4], 1

</llo_original>
